<compile_context>
chip_gen: v5e
topology: v5e:2x2
jax: 0.10.0
libtpu: 0.0.40
codegen_flags: <defaults>
</compile_context>

<pallas_src>
import functools

import jax
import jax.numpy as jnp
from jax.experimental import pallas as pl
from jax.experimental.pallas import tpu as pltpu
from jax.scipy.special import gammaln

LANE = 128


def _round_up(v, m):
    return ((v + m - 1) // m) * m


# ----------------------------------------------------------------------------
# Pallas kernel 1: generate conv weights from gamma mixture parameters.
#   amp/shp/loc/c/iscl refs : (NG, TK_TILE)  per-gamma params, TK on lanes
#   out_ref                 : (K,  TK_TILE)  generated kernel weights
# ----------------------------------------------------------------------------
def gamma_kernel_gen_kernel(amp_ref, shp_ref, loc_ref, c_ref, iscl_ref,
                            out_ref):
    # positions 0..K-1 along the sublane axis, broadcast over the TK lanes.
    pos = jax.lax.broadcasted_iota(jnp.int32, out_ref.shape, 0)
    pos = pos.astype(jnp.float32)                          # (K, TK_TILE)
    num_gammas = amp_ref.shape[0]

    acc = None
    for g in range(num_gammas):                            # static, small (=2)
        amp = amp_ref[g:g + 1, :]                          # (1, TK_TILE)
        shp = shp_ref[g:g + 1, :]
        loc = loc_ref[g:g + 1, :]
        c = c_ref[g:g + 1, :]                              # -shp*log(scl)-lgamma(shp)
        iscl = iscl_ref[g:g + 1, :]                        # 1/scl
        x_shifted = pos - loc                              # (K, TK_TILE)
        x_clamped = jnp.maximum(x_shifted, 1e-8)
        log_pdf = c + (shp - 1.0) * jnp.log(x_clamped) - x_clamped * iscl
        # mask the exponent (not the pdf): no overflow at invalid positions
        log_pdf = jnp.where(x_shifted > 0.0, log_pdf, -jnp.inf)
        term = amp * jnp.exp(log_pdf)
        acc = term if acc is None else acc + term
    out_ref[...] = acc.astype(out_ref.dtype)


def generate_kernels_pallas(amp, shp, loc, c, iscl, kernel_size, tk_tile,
                            out_dtype):
    num_gammas, tk_pad = amp.shape
    assert tk_pad % tk_tile == 0
    grid = (tk_pad // tk_tile,)
    param_spec = pl.BlockSpec((num_gammas, tk_tile), lambda i: (0, i))
    return pl.pallas_call(
        gamma_kernel_gen_kernel,
        out_shape=jax.ShapeDtypeStruct((kernel_size, tk_pad), out_dtype),
        grid=grid,
        in_specs=[param_spec] * 5,
        out_specs=pl.BlockSpec((kernel_size, tk_tile), lambda i: (0, i)),
        compiler_params=pltpu.CompilerParams(
            dimension_semantics=("parallel",)),
    )(amp, shp, loc, c, iscl)


# ----------------------------------------------------------------------------
# Pallas kernel 2: fused direct conv1d, K taps folded into one MXU dot.
#   x_hbm : (N_pad, C_in, L_total)        full padded input, stays in HBM
#   w_ref : (C_out, K*C_in)               folded weights (compute dtype)
#   b_ref : (C_out, 1)                    bias (f32)
#   o_ref : (B_TILE, C_out, TL)           lane-dense output tile (f32)
#   xbuf  : (B_TILE, C_in, TL_in)         VMEM scratch for the halo'd window
# ----------------------------------------------------------------------------
def conv1d_kernel(x_hbm, w_ref, b_ref, o_ref, xbuf, sem, *,
                  k_size, dilation, tl_in, b_tile):
    bi = pl.program_id(0)
    li = pl.program_id(1)
    tl = o_ref.shape[2]

    # Halo'd input window for this (batch-tile, L-tile): manual DMA HBM->VMEM.
    start = pl.multiple_of(li * tl, 128)
    cp = pltpu.make_async_copy(
        x_hbm.at[pl.ds(bi * b_tile, b_tile), :, pl.ds(start, tl_in)],
        xbuf, sem)
    cp.start()
    cp.wait()

    w = w_ref[...]                                         # (C_out, K*C_in)
    b = b_ref[...]                                         # (C_out, 1)
    for bb in range(b_tile):                               # static, small
        # Shifted slab (K*C_in, TL): one lane-contiguous slice per tap,
        # consumed by a single full-depth MXU contraction.
        slab = jnp.concatenate(
            [xbuf[bb, :, pl.ds(k * dilation, tl)] for k in range(k_size)],
            axis=0)
        acc = jnp.dot(w, slab, preferred_element_type=jnp.float32)
        o_ref[bb, :, :] = (acc + b).astype(o_ref.dtype)


def conv1d_direct_pallas(x_padded, w_folded, bias_2d, *, tl, n_l, tl_in,
                         b_tile, kernel_size, dilation):
    n_pad, c_in, l_total = x_padded.shape
    c_out, kc = w_folded.shape
    n_b = n_pad // b_tile
    cdtype = x_padded.dtype
    item = jnp.dtype(cdtype).itemsize

    flops = int(2 * n_pad * c_out * kc * n_l * tl)
    bytes_accessed = int(x_padded.size * item + w_folded.size * item
                         + bias_2d.size * 4 + n_pad * c_out * n_l * tl * 4)
    # double-buffered out + w + bias (BlockSpec) + manual scratch, with margin.
    vmem_need = (2 * b_tile * c_out * tl * 4
                 + 2 * c_out * _round_up(kc, LANE) * item
                 + 2 * _round_up(c_out, 8) * LANE * 4
                 + b_tile * c_in * tl_in * item
                 + kc * tl * item)
    vmem_limit = int(min(48 * 2**20, max(4 * 2**20, vmem_need * 4)))

    kernel = functools.partial(conv1d_kernel, k_size=kernel_size,
                               dilation=dilation, tl_in=tl_in, b_tile=b_tile)
    return pl.pallas_call(
        kernel,
        out_shape=jax.ShapeDtypeStruct((n_pad, c_out, n_l * tl), jnp.float32),
        grid=(n_b, n_l),
        in_specs=[
            pl.BlockSpec(memory_space=pl.ANY),                       # x (HBM)
            pl.BlockSpec((c_out, kc), lambda bi, li: (0, 0)),        # weights
            pl.BlockSpec((c_out, 1), lambda bi, li: (0, 0)),         # bias
        ],
        out_specs=pl.BlockSpec((b_tile, c_out, tl), lambda bi, li: (bi, 0, li)),
        scratch_shapes=[
            pltpu.VMEM((b_tile, c_in, tl_in), cdtype),
            pltpu.SemaphoreType.DMA(()),
        ],
        compiler_params=pltpu.CompilerParams(
            dimension_semantics=("parallel", "parallel"),
            vmem_limit_bytes=vmem_limit),
        cost_estimate=pl.CostEstimate(flops=flops, transcendentals=0,
                                      bytes_accessed=bytes_accessed),
    )(x_padded, w_folded, bias_2d)


# ----------------------------------------------------------------------------
# Parameter init (mirrors ParametricGammaKernelConv1d._init_params, with
# jax.random for deterministic in-script initialization).
# ----------------------------------------------------------------------------
def init_gamma_params(key, out_channels, in_channels, kernel_size,
                      num_gammas_per_kernel=2):
    cols = []
    for i in range(num_gammas_per_kernel):
        key, k0, k1, k2, k3 = jax.random.split(key, 5)
        base_loc = i * kernel_size / max(num_gammas_per_kernel, 2)
        amp = jax.random.normal(k0, (out_channels, in_channels)) * 0.1 + 0.5
        shp = jax.random.normal(k1, (out_channels, in_channels)) * 0.2 + (2.0 + i)
        scl = jax.random.normal(k2, (out_channels, in_channels)) * 0.2 + 1.0
        loc = jax.random.normal(k3, (out_channels, in_channels)) * 0.5 + base_loc
        cols += [amp, shp, scl, loc]
    return jnp.stack(cols, axis=-1).astype(jnp.float32)   # (OC, IC, NG*4)


# ----------------------------------------------------------------------------
# Forward pass (glue in plain JAX, hot paths in Pallas).
# ----------------------------------------------------------------------------
def gamma_conv1d_forward(x, gamma_params, bias, *, kernel_size, stride=1,
                         padding=0, dilation=1, groups=1,
                         num_gammas_per_kernel=2,
                         compute_dtype=jnp.bfloat16):
    assert groups == 1, "only groups=1 implemented"
    out_channels, in_channels, _ = gamma_params.shape
    n, c_in, length = x.shape
    assert c_in == in_channels

    # --- parameter constraints + hoisted per-gamma constants (tiny, glue) ---
    amps, shps, scls, locs = [], [], [], []
    for g in range(num_gammas_per_kernel):
        s = g * 4
        amps.append(gamma_params[:, :, s].reshape(-1))
        shps.append(jax.nn.softplus(gamma_params[:, :, s + 1]).reshape(-1) + 1e-6)
        scls.append(jax.nn.softplus(gamma_params[:, :, s + 2]).reshape(-1) + 1e-6)
        locs.append(gamma_params[:, :, s + 3].reshape(-1))
    amp = jnp.stack(amps, axis=0)                          # (NG, TK)
    shp = jnp.stack(shps, axis=0)
    scl = jnp.stack(scls, axis=0)
    loc = jnp.stack(locs, axis=0)
    c = -shp * jnp.log(scl) - gammaln(shp)                 # hoisted
    iscl = 1.0 / scl                                       # hoisted

    # Pad the TK axis (lanes) to a wide tile (edge values; discarded lanes).
    tk = out_channels * in_channels
    tk_pad = _round_up(tk, LANE)
    tk_tile = min(tk_pad, 2048)
    tk_pad = _round_up(tk_pad, tk_tile)
    if tk_pad != tk:
        pad_cfg = ((0, 0), (0, tk_pad - tk))
        amp, shp, loc, c, iscl = [jnp.pad(a, pad_cfg, mode="edge")
                                  for a in (amp, shp, loc, c, iscl)]

    # --- Pallas: generate conv kernels directly in the compute dtype --------
    kernels_flat = generate_kernels_pallas(
        amp, shp, loc, c, iscl, kernel_size, tk_tile, compute_dtype)[:, :tk]
    # lane index oc*IC + ic -> (K, OC, IC) -> folded (OC, K*IC) for one dot.
    w_koi = kernels_flat.reshape(kernel_size, out_channels, in_channels)
    w_folded = jnp.transpose(w_koi, (1, 0, 2)).reshape(
        out_channels, kernel_size * in_channels)

    # --- tiling: the kernel always runs at stride 1; decimate afterwards ----
    l_full = length + 2 * padding - dilation * (kernel_size - 1)
    assert l_full >= 1, "kernel does not fit in the (padded) input"
    l_out = (l_full - 1) // stride + 1

    l_out_pad = _round_up(l_full, LANE)
    tl = min(512, l_out_pad)
    l_out_pad = _round_up(l_out_pad, tl)
    n_l = l_out_pad // tl
    tl_in = _round_up(tl + dilation * (kernel_size - 1), LANE)
    l_total = (n_l - 1) * tl + tl_in

    b_tile = min(n, 8)
    n_pad = _round_up(n, b_tile)

    x_c = x.astype(compute_dtype)
    x_padded = jnp.pad(
        x_c, ((0, n_pad - n), (0, 0), (padding, l_total - length - padding)))

    # --- Pallas: fused direct conv1d (folded MXU contraction) + bias --------
    out_full = conv1d_direct_pallas(
        x_padded, w_folded, bias.reshape(out_channels, 1).astype(jnp.float32),
        tl=tl, n_l=n_l, tl_in=tl_in, b_tile=b_tile,
        kernel_size=kernel_size, dilation=dilation)        # (N_pad, OC, L_pad)

    out = out_full[:n, :, :l_full]
    if stride > 1:
        out = out[:, :, ::stride]
    return out[:, :, :l_out]


# ----------------------------------------------------------------------------
# Pure-JAX reference (mirrors the PyTorch forward) for correctness checking.
# ----------------------------------------------------------------------------
def reference_forward(x, gamma_params, bias, *, kernel_size, stride, padding,
                      dilation, num_gammas_per_kernel):
    oc, ic, _ = gamma_params.shape
    pos = jnp.arange(kernel_size, dtype=jnp.float32)
    all_k = jnp.zeros((oc * ic, kernel_size), jnp.float32)
    for g in range(num_gammas_per_kernel):
        s = g * 4
        amp = gamma_params[:, :, s].reshape(-1)
        shp = jax.nn.softplus(gamma_params[:, :, s + 1]).reshape(-1) + 1e-6
        scl = jax.nn.softplus(gamma_params[:, :, s + 2]).reshape(-1) + 1e-6
        loc = gamma_params[:, :, s + 3].reshape(-1)
        xs = pos[None, :] - loc[:, None]
        xc = jnp.maximum(xs, 1e-8)
        log_pdf = (-shp[:, None] * jnp.log(scl)[:, None]
                   - gammaln(shp)[:, None]
                   + (shp[:, None] - 1.0) * jnp.log(xc)
                   - xc / scl[:, None])
        pdf = jnp.where(xs > 0, jnp.exp(log_pdf), 0.0)
        all_k = all_k + amp[:, None] * pdf
    kernels = all_k.reshape(oc, ic, kernel_size)
    out = jax.lax.conv_general_dilated(
        x, kernels, window_strides=(stride,), padding=[(padding, padding)],
        rhs_dilation=(dilation,), dimension_numbers=("NCH", "OIH", "NCH"))
    return out + bias[None, :, None]


def _check_case(*, batch, in_channels, out_channels, length, kernel_size,
                stride, padding, dilation, num_gammas, seed, compute_dtype,
                tol):
    key = jax.random.PRNGKey(seed)
    kp, kx, kb = jax.random.split(key, 3)
    gamma_params = init_gamma_params(kp, out_channels, in_channels,
                                     kernel_size, num_gammas)
    bias = jax.random.normal(kb, (out_channels,), jnp.float32) * 0.1
    x = jax.random.normal(kx, (batch, in_channels, length), jnp.float32)

    out = gamma_conv1d_forward(
        x, gamma_params, bias, kernel_size=kernel_size, stride=stride,
        padding=padding, dilation=dilation, groups=1,
        num_gammas_per_kernel=num_gammas, compute_dtype=compute_dtype)
    out = jax.block_until_ready(out)

    ref = reference_forward(x, gamma_params, bias, kernel_size=kernel_size,
                            stride=stride, padding=padding, dilation=dilation,
                            num_gammas_per_kernel=num_gammas)
    ref = jax.block_until_ready(ref)

    l_out = (length + 2 * padding - dilation * (kernel_size - 1) - 1) // stride + 1
    assert out.shape == (batch, out_channels, l_out), (out.shape, ref.shape)
    assert jnp.allclose(out, ref, rtol=tol, atol=tol), \
        f"max diff {jnp.max(jnp.abs(out - ref))} (dtype={compute_dtype})"


if __name__ == "__main__":
    # Small, conv1d-consistent shapes: x is (batch, in_channels, length).
    small = dict(batch=2, in_channels=4, out_channels=8, length=16,
                 kernel_size=5, stride=1, padding=2, dilation=1,
                 num_gammas=2, seed=0)
    # f32 path: tight check against the f32 reference.
    _check_case(**small, compute_dtype=jnp.float32, tol=2e-3)
    # bf16 path (default fast path): f32 accumulation, looser tolerance.
    _check_case(**small, compute_dtype=jnp.bfloat16, tol=2e-2)

    # Larger case exercising multi-tile L, batch tiling, stride>1, dilation>1.
    bigger = dict(batch=2, in_channels=8, out_channels=16, length=700,
                  kernel_size=7, stride=2, padding=3, dilation=2,
                  num_gammas=2, seed=1)
    _check_case(**bigger, compute_dtype=jnp.float32, tol=2e-3)

    print("KERNEL_OK")
</pallas_src>

<mosaic_0001>
module attributes {stable_mosaic.version = 11 : i64} {
  func.func @gamma_kernel_gen_kernel(%arg0: i32, %arg1: memref<2x128xf32, #tpu.memory_space<vmem>>, %arg2: memref<2x128xf32, #tpu.memory_space<vmem>>, %arg3: memref<2x128xf32, #tpu.memory_space<vmem>>, %arg4: memref<2x128xf32, #tpu.memory_space<vmem>>, %arg5: memref<2x128xf32, #tpu.memory_space<vmem>>, %arg6: memref<5x128xf32, #tpu.memory_space<vmem>>) attributes {dimension_semantics = [#tpu.dimension_semantics<parallel>], iteration_bounds = array<i64: 1>, scalar_prefetch = 0 : i64, scratch_operands = 0 : i64, tpu.core_type = #tpu.core_type<tc>, window_params = [{transform_indices = @transform_0, window_bounds = array<i64: 2, 128>}, {transform_indices = @transform_1, window_bounds = array<i64: 2, 128>}, {transform_indices = @transform_2, window_bounds = array<i64: 2, 128>}, {transform_indices = @transform_3, window_bounds = array<i64: 2, 128>}, {transform_indices = @transform_4, window_bounds = array<i64: 2, 128>}, {transform_indices = @transform_5, window_bounds = array<i64: 5, 128>}]} {
    %0 = tpu.iota {dimensions = array<i32: 0>} : vector<5x128xi32>
    %1 = arith.sitofp %0 : vector<5x128xi32> to vector<5x128xf32>
    %c0 = arith.constant 0 : index
    %c0_0 = arith.constant 0 : index
    %2 = vector.load %arg1[%c0, %c0_0] : memref<2x128xf32, #tpu.memory_space<vmem>>, vector<1x128xf32>
    %c0_1 = arith.constant 0 : index
    %c0_2 = arith.constant 0 : index
    %3 = vector.load %arg2[%c0_1, %c0_2] : memref<2x128xf32, #tpu.memory_space<vmem>>, vector<1x128xf32>
    %c0_3 = arith.constant 0 : index
    %c0_4 = arith.constant 0 : index
    %4 = vector.load %arg3[%c0_3, %c0_4] : memref<2x128xf32, #tpu.memory_space<vmem>>, vector<1x128xf32>
    %c0_5 = arith.constant 0 : index
    %c0_6 = arith.constant 0 : index
    %5 = vector.load %arg4[%c0_5, %c0_6] : memref<2x128xf32, #tpu.memory_space<vmem>>, vector<1x128xf32>
    %c0_7 = arith.constant 0 : index
    %c0_8 = arith.constant 0 : index
    %6 = vector.load %arg5[%c0_7, %c0_8] : memref<2x128xf32, #tpu.memory_space<vmem>>, vector<1x128xf32>
    %7 = vector.broadcast %4 : vector<1x128xf32> to vector<5x128xf32>
    %8 = arith.subf %1, %7 : vector<5x128xf32>
    %cst = arith.constant 9.99999993E-9 : f32
    %9 = vector.broadcast %cst : f32 to vector<5x128xf32>
    %10 = arith.maximumf %8, %9 : vector<5x128xf32>
    %cst_9 = arith.constant 1.000000e+00 : f32
    %11 = vector.broadcast %cst_9 : f32 to vector<1x128xf32>
    %12 = arith.subf %3, %11 : vector<1x128xf32>
    %13 = math.log %10 : vector<5x128xf32>
    %14 = vector.broadcast %12 : vector<1x128xf32> to vector<5x128xf32>
    %15 = arith.mulf %14, %13 : vector<5x128xf32>
    %16 = vector.broadcast %5 : vector<1x128xf32> to vector<5x128xf32>
    %17 = arith.addf %16, %15 : vector<5x128xf32>
    %18 = vector.broadcast %6 : vector<1x128xf32> to vector<5x128xf32>
    %19 = arith.mulf %10, %18 : vector<5x128xf32>
    %20 = arith.subf %17, %19 : vector<5x128xf32>
    %cst_10 = arith.constant 0.000000e+00 : f32
    %21 = vector.broadcast %cst_10 : f32 to vector<5x128xf32>
    %22 = arith.cmpf ogt, %8, %21 : vector<5x128xf32>
    %cst_11 = arith.constant 0xFF800000 : f32
    %23 = vector.broadcast %cst_11 : f32 to vector<5x128xf32>
    %24 = arith.select %22, %20, %23 : vector<5x128xi1>, vector<5x128xf32>
    %25 = math.exp %24 : vector<5x128xf32>
    %26 = vector.broadcast %2 : vector<1x128xf32> to vector<5x128xf32>
    %27 = arith.mulf %26, %25 : vector<5x128xf32>
    %c1 = arith.constant 1 : index
    %c0_12 = arith.constant 0 : index
    %28 = vector.load %arg1[%c1, %c0_12] : memref<2x128xf32, #tpu.memory_space<vmem>>, vector<1x128xf32>
    %c1_13 = arith.constant 1 : index
    %c0_14 = arith.constant 0 : index
    %29 = vector.load %arg2[%c1_13, %c0_14] : memref<2x128xf32, #tpu.memory_space<vmem>>, vector<1x128xf32>
    %c1_15 = arith.constant 1 : index
    %c0_16 = arith.constant 0 : index
    %30 = vector.load %arg3[%c1_15, %c0_16] : memref<2x128xf32, #tpu.memory_space<vmem>>, vector<1x128xf32>
    %c1_17 = arith.constant 1 : index
    %c0_18 = arith.constant 0 : index
    %31 = vector.load %arg4[%c1_17, %c0_18] : memref<2x128xf32, #tpu.memory_space<vmem>>, vector<1x128xf32>
    %c1_19 = arith.constant 1 : index
    %c0_20 = arith.constant 0 : index
    %32 = vector.load %arg5[%c1_19, %c0_20] : memref<2x128xf32, #tpu.memory_space<vmem>>, vector<1x128xf32>
    %33 = vector.broadcast %30 : vector<1x128xf32> to vector<5x128xf32>
    %34 = arith.subf %1, %33 : vector<5x128xf32>
    %cst_21 = arith.constant 9.99999993E-9 : f32
    %35 = vector.broadcast %cst_21 : f32 to vector<5x128xf32>
    %36 = arith.maximumf %34, %35 : vector<5x128xf32>
    %cst_22 = arith.constant 1.000000e+00 : f32
    %37 = vector.broadcast %cst_22 : f32 to vector<1x128xf32>
    %38 = arith.subf %29, %37 : vector<1x128xf32>
    %39 = math.log %36 : vector<5x128xf32>
    %40 = vector.broadcast %38 : vector<1x128xf32> to vector<5x128xf32>
    %41 = arith.mulf %40, %39 : vector<5x128xf32>
    %42 = vector.broadcast %31 : vector<1x128xf32> to vector<5x128xf32>
    %43 = arith.addf %42, %41 : vector<5x128xf32>
    %44 = vector.broadcast %32 : vector<1x128xf32> to vector<5x128xf32>
    %45 = arith.mulf %36, %44 : vector<5x128xf32>
    %46 = arith.subf %43, %45 : vector<5x128xf32>
    %cst_23 = arith.constant 0.000000e+00 : f32
    %47 = vector.broadcast %cst_23 : f32 to vector<5x128xf32>
    %48 = arith.cmpf ogt, %34, %47 : vector<5x128xf32>
    %cst_24 = arith.constant 0xFF800000 : f32
    %49 = vector.broadcast %cst_24 : f32 to vector<5x128xf32>
    %50 = arith.select %48, %46, %49 : vector<5x128xi1>, vector<5x128xf32>
    %51 = math.exp %50 : vector<5x128xf32>
    %52 = vector.broadcast %28 : vector<1x128xf32> to vector<5x128xf32>
    %53 = arith.mulf %52, %51 : vector<5x128xf32>
    %54 = arith.addf %27, %53 : vector<5x128xf32>
    %c0_25 = arith.constant 0 : index
    %c0_26 = arith.constant 0 : index
    %55 = vector.load %arg6[%c0_25, %c0_26] : memref<5x128xf32, #tpu.memory_space<vmem>>, vector<5x128xf32>
    tpu.vector_store %arg6[%c0_25, %c0_26], %54 {strides = array<i32>} : memref<5x128xf32, #tpu.memory_space<vmem>>, vector<5x128xf32>,
    return
  }
  func.func @transform_0(%arg0: i32) -> (i32, i32) {
    %c0_i32 = arith.constant 0 : i32
    %c0_i32_0 = arith.constant 0 : i32
    return %c0_i32, %arg0 : i32, i32
  }
  func.func @transform_1(%arg0: i32) -> (i32, i32) {
    %c0_i32 = arith.constant 0 : i32
    %c0_i32_0 = arith.constant 0 : i32
    return %c0_i32, %arg0 : i32, i32
  }
  func.func @transform_2(%arg0: i32) -> (i32, i32) {
    %c0_i32 = arith.constant 0 : i32
    %c0_i32_0 = arith.constant 0 : i32
    return %c0_i32, %arg0 : i32, i32
  }
  func.func @transform_3(%arg0: i32) -> (i32, i32) {
    %c0_i32 = arith.constant 0 : i32
    %c0_i32_0 = arith.constant 0 : i32
    return %c0_i32, %arg0 : i32, i32
  }
  func.func @transform_4(%arg0: i32) -> (i32, i32) {
    %c0_i32 = arith.constant 0 : i32
    %c0_i32_0 = arith.constant 0 : i32
    return %c0_i32, %arg0 : i32, i32
  }
  func.func @transform_5(%arg0: i32) -> (i32, i32) {
    %c0_i32 = arith.constant 0 : i32
    %c0_i32_0 = arith.constant 0 : i32
    return %c0_i32, %arg0 : i32, i32
  }
}

</mosaic_0001>

<llo_original>
// kernel: tpu_custom_call.1
$region0: #{tpu_custom_call.1}
  #allocation0 [shape = 'u32[]', space=smem, size = 0x4, offset = 0x4, fixed_abs, tag = 'smem constant byte address 0x4 - core index']
  #allocation1 [shape = 'u32[72,128]{1,0:T(1,128)}', space=vmem, size = 0x9000, scoped, tag = 'internal scratch']
  %s0 = inlined_call_operand.hbm [shape: f32[2,128], index: 0, kind: input, shape index: {}]
  %s1 = inlined_call_operand.hbm [shape: f32[2,128], index: 1, kind: input, shape index: {}]
  %s2 = inlined_call_operand.hbm [shape: f32[2,128], index: 2, kind: input, shape index: {}]
  %s3 = inlined_call_operand.vmem [shape: f32[2,128], index: 3, kind: input, shape index: {}]
  %s4 = inlined_call_operand.hbm [shape: f32[2,128], index: 4, kind: input, shape index: {}]
  %s5 = inlined_call_operand.hbm [shape: f32[5,128], index: 5, kind: output, shape index: {}]
  %s6 = sld [smem:[#allocation0]]
  $region46: #{tpu_custom_call.1} parent=0
    _
  %s8 = ssub.s32 1, %s6
  %s9 = scalar_select 0, %s8, %s6
  $region1: #{tpu_custom_call.1} parent=0
    #allocation2 [shape = 'u8[1024]{0}', space=vmem, size = 0x400, scoped, tag = 'input window, operand 0, single buffered']
    #allocation3 [shape = 's32[1]{0}', space=sflag, size = 0x4, scoped, tag = 'scoped memory for tpu_custom_call.1']
    #allocation4 [shape = 's32[1]{0}', space=sflag, size = 0x4, scoped, tag = 'scoped memory for tpu_custom_call.1']
    #allocation5 [shape = 'u8[1024]{0}', space=vmem, size = 0x400, scoped, tag = 'input window, operand 1, single buffered']
    #allocation6 [shape = 's32[1]{0}', space=sflag, size = 0x4, scoped, tag = 'scoped memory for tpu_custom_call.1']
    #allocation7 [shape = 'u8[1024]{0}', space=vmem, size = 0x400, scoped, tag = 'input window, operand 2, single buffered']
    #allocation8 [shape = 'u8[1024]{0}', space=vmem, size = 0x400, scoped, tag = 'input window, operand 4, single buffered']
    #allocation9 [shape = 's32[1]{0}', space=sflag, size = 0x4, scoped, tag = 'scoped memory for tpu_custom_call.1']
    #allocation10 [shape = 'u8[4096]{0}', space=vmem, size = 0x1000, scoped, tag = 'output window, operand 0, single buffered']
    %10 = vsyncpa [#allocation3], 0
    %11 = vsyncpa [#allocation6], 0
    %12 = vsyncpa [#allocation9], 0
    %13 = vsyncpa [#allocation4], 0
    // Predicated region
    $region2: #{tpu_custom_call.1} parent=1 // pred_check
      _
    $region3: #{tpu_custom_call.1} parent=1 // pred_check_branch
      %15 = sbr.rel (0) target = $region5
    $region4: #{tpu_custom_call.1} parent=1 // pred_region
      %17 = vsyncadd [#allocation3], 0
      %s19 = sshll.u32 %s0, 4
      %s20 = int_to_ptr.hbm [resolvable:$true] %s19
      %s21 = sshll.u32 [#allocation2], 4
      %s22 = int_to_ptr.vmem [resolvable:$true] %s21
      %24 = dma.hbm_to_vmem [thread:$0]  %s20, 32, %s22, [#allocation3]
    $region5: #{tpu_custom_call.1} parent=1 // pred_fallthru
      _
    // Predicated region
    $region6: #{tpu_custom_call.1} parent=1 // pred_check
      _
    $region7: #{tpu_custom_call.1} parent=1 // pred_check_branch
      %26 = sbr.rel (0) target = $region9
    $region8: #{tpu_custom_call.1} parent=1 // pred_region
      %28 = vsyncadd [#allocation6], 0
      %s30 = sshll.u32 %s1, 4
      %s31 = int_to_ptr.hbm [resolvable:$true] %s30
      %s32 = sshll.u32 [#allocation5], 4
      %s33 = int_to_ptr.vmem [resolvable:$true] %s32
      %35 = dma.hbm_to_vmem [thread:$0]  %s31, 32, %s33, [#allocation6]
    $region9: #{tpu_custom_call.1} parent=1 // pred_fallthru
      _
    // Predicated region
    $region10: #{tpu_custom_call.1} parent=1 // pred_check
      _
    $region11: #{tpu_custom_call.1} parent=1 // pred_check_branch
      %37 = sbr.rel (0) target = $region13
    $region12: #{tpu_custom_call.1} parent=1 // pred_region
      %39 = vsyncadd [#allocation6], 0
      %s41 = sshll.u32 %s2, 4
      %s42 = int_to_ptr.hbm [resolvable:$true] %s41
      %s43 = sshll.u32 [#allocation7], 4
      %s44 = int_to_ptr.vmem [resolvable:$true] %s43
      %46 = dma.hbm_to_vmem [thread:$0]  %s42, 32, %s44, [#allocation6]
    $region13: #{tpu_custom_call.1} parent=1 // pred_fallthru
      _
    // Predicated region
    $region14: #{tpu_custom_call.1} parent=1 // pred_check
      _
    $region15: #{tpu_custom_call.1} parent=1 // pred_check_branch
      %48 = sbr.rel (0) target = $region17
    $region16: #{tpu_custom_call.1} parent=1 // pred_region
      _
    $region17: #{tpu_custom_call.1} parent=1 // pred_fallthru
      _
    // Predicated region
    $region18: #{tpu_custom_call.1} parent=1 // pred_check
      _
    $region19: #{tpu_custom_call.1} parent=1 // pred_check_branch
      %50 = sbr.rel (0) target = $region21
    $region20: #{tpu_custom_call.1} parent=1 // pred_region
      %52 = vsyncadd [#allocation9], 0
      %s54 = sshll.u32 %s4, 4
      %s55 = int_to_ptr.hbm [resolvable:$true] %s54
      %s56 = sshll.u32 [#allocation8], 4
      %s57 = int_to_ptr.vmem [resolvable:$true] %s56
      %59 = dma.hbm_to_vmem [thread:$0]  %s55, 32, %s57, [#allocation9]
    $region21: #{tpu_custom_call.1} parent=1 // pred_fallthru
      _
    // Predicated region
    $region22: #{tpu_custom_call.1} parent=1 // pred_check
      _
    $region23: #{tpu_custom_call.1} parent=1 // pred_check_branch
      %61 = sbr.rel (0) target = $region25
    $region24: #{tpu_custom_call.1} parent=1 // pred_region
      %63 = dma.done [#allocation3], 32
    $region25: #{tpu_custom_call.1} parent=1 // pred_fallthru
      _
    // Predicated region
    $region26: #{tpu_custom_call.1} parent=1 // pred_check
      _
    $region27: #{tpu_custom_call.1} parent=1 // pred_check_branch
      %65 = sbr.rel (0) target = $region29
    $region28: #{tpu_custom_call.1} parent=1 // pred_region
      %67 = dma.done [#allocation6], 32
    $region29: #{tpu_custom_call.1} parent=1 // pred_fallthru
      _
    // Predicated region
    $region30: #{tpu_custom_call.1} parent=1 // pred_check
      _
    $region31: #{tpu_custom_call.1} parent=1 // pred_check_branch
      %69 = sbr.rel (0) target = $region33
    $region32: #{tpu_custom_call.1} parent=1 // pred_region
      %71 = dma.done [#allocation6], 32
    $region33: #{tpu_custom_call.1} parent=1 // pred_fallthru
      _
    // Predicated region
    $region34: #{tpu_custom_call.1} parent=1 // pred_check
      _
    $region35: #{tpu_custom_call.1} parent=1 // pred_check_branch
      %73 = sbr.rel (0) target = $region37
    $region36: #{tpu_custom_call.1} parent=1 // pred_region
      %75 = dma.done [#allocation9], 32
    $region37: #{tpu_custom_call.1} parent=1 // pred_fallthru
      _
    %v76 = vlaneseq
    %v77 = vshrl.u32 %v76, 7
    %v78 = vcvt.s32.f32 %v77
    %v79 = vld [vmem:[#allocation2] sm:$0x1]
    %v80 = vld [vmem:[#allocation5] sm:$0x1]
    %v81 = vld [vmem:[#allocation7] sm:$0x1]
    %v82 = vld [vmem:[%s3] sm:$0x1]
    %v83 = vld [vmem:[#allocation8] sm:$0x1]
    %v84 = vperm.slane %v81, 0
    %v85 = vsub.f32 %v78, %v84
    %v86 = vmax.f32 %v85, 1e-08
    %v87 = vsub.f32 %v80, 1.0
    %v88 = vlog2.pop %v86
    %v89 = vmul.f32 %v88, 0.6931472
    %v90 = vperm.slane %v87, 0
    %v91 = vmul.f32 %v90, %v89
    %v92 = vperm.slane %v82, 0
    %v93 = vadd.f32 %v92, %v91
    %v94 = vperm.slane %v83, 0
    %v95 = vmul.f32 %v86, %v94
    %v96 = vsub.f32 %v93, %v95
    %vm97 = vcmp.gt.f32.partialorder %v85, 0.0
    %v98 = vsel %vm97, %v96, -inf
    %v99 = vmul.f32 %v98, 1.442695
    %v100 = vpow.pop %v99
    %v101 = vperm.slane %v79, 0
    %v102 = vmul.f32 %v101, %v100
    %v103 = vld [vmem:[#allocation2 + $0x1] sm:$0x1]
    %v104 = vld [vmem:[#allocation5 + $0x1] sm:$0x1]
    %v105 = vld [vmem:[#allocation7 + $0x1] sm:$0x1]
    %v106 = vld [vmem:[%s3 + $0x1] sm:$0x1]
    %v107 = vld [vmem:[#allocation8 + $0x1] sm:$0x1]
    %v108 = vperm.slane %v105, 0
    %v109 = vsub.f32 %v78, %v108
    %v110 = vmax.f32 %v109, 1e-08
    %v111 = vsub.f32 %v104, 1.0
    %v112 = vlog2.pop %v110
    %v113 = vmul.f32 %v112, 0.6931472
    %v114 = vperm.slane %v111, 0
    %v115 = vmul.f32 %v114, %v113
    %v116 = vperm.slane %v106, 0
    %v117 = vadd.f32 %v116, %v115
    %v118 = vperm.slane %v107, 0
    %v119 = vmul.f32 %v110, %v118
    %v120 = vsub.f32 %v117, %v119
    %vm121 = vcmp.gt.f32.partialorder %v109, 0.0
    %v122 = vsel %vm121, %v120, -inf
    %v123 = vmul.f32 %v122, 1.442695
    %v124 = vpow.pop %v123
    %v125 = vperm.slane %v103, 0
    %v126 = vmul.f32 %v125, %v124
    %v127 = vadd.f32 %v102, %v126
    %128 = vst [vmem:[#allocation10] sm:$0x1f] %v127
    // Predicated region
    $region38: #{tpu_custom_call.1} parent=1 // pred_check
      _
    $region39: #{tpu_custom_call.1} parent=1 // pred_check_branch
      %130 = sbr.rel (0) target = $region41
    $region40: #{tpu_custom_call.1} parent=1 // pred_region
      %132 = vsyncadd [#allocation4], 0
      %s134 = sshll.u32 [#allocation10], 4
      %s135 = int_to_ptr.vmem [resolvable:$true] %s134
      %s136 = sshll.u32 %s5, 4
      %s137 = int_to_ptr.hbm [resolvable:$true] %s136
      %139 = dma.vmem_to_hbm [thread:$0]  %s135, 128, %s137, [#allocation4]
    $region41: #{tpu_custom_call.1} parent=1 // pred_fallthru
      _
    // Predicated region
    $region42: #{tpu_custom_call.1} parent=1 // pred_check
      _
    $region43: #{tpu_custom_call.1} parent=1 // pred_check_branch
      %141 = sbr.rel (0) target = $region45
    $region44: #{tpu_custom_call.1} parent=1 // pred_region
      %143 = dma.done [#allocation4], 128
    $region45: #{tpu_custom_call.1} parent=1 // pred_fallthru
      _
    %144 = vsyncpa [#allocation3], 1
    %145 = vsyncpa [#allocation6], 1
    %146 = vsyncpa [#allocation9], 1
    %147 = vsyncpa [#allocation4], 1

</llo_original>
